<compile_context>
chip_gen: v7x
topology: tpu7x:2x2x1
jax: 0.10.0
libtpu: 0.0.40
codegen_flags: <defaults>
</compile_context>

<pallas_src>
import functools

import jax
import jax.numpy as jnp
from jax import lax
from jax.experimental import pallas as pl
from jax.experimental.pallas import tpu as pltpu

BN_EPS = 1e-5
# Conservative scoped-VMEM budget: above v5e's 16 MiB default, at v6e/v7x's
# 32 MiB default, comfortably below v7x's 64 MiB physical VMEM.  The tile
# sizes below keep the working set well under this.
_VMEM_LIMIT_BYTES = 32 * 1024 * 1024


def _round_up(x, m):
    return ((x + m - 1) // m) * m


# ---------------------------------------------------------------------------
# Kernel 1: Conv(4,2,1) as tiled im2col matmul + folded (bias+BN) + ReLU.
# ---------------------------------------------------------------------------
def conv_bn_relu_kernel(p_ref, w_ref, shift_ref, o_ref):
    # p_ref: [TILE_M, K] bf16, w_ref: [K, Cout] bf16 (BN scale pre-folded),
    # shift_ref: [1, Cout] f32, o_ref: [TILE_M, Cout] bf16.
    acc = jnp.dot(p_ref[...], w_ref[...], preferred_element_type=jnp.float32)
    o_ref[...] = jnp.maximum(acc + shift_ref[...], 0.0).astype(o_ref.dtype)


def conv_bn_relu(patches, w_mat, shift, *, out_dtype=jnp.bfloat16, tile_m=1024):
    """patches [M, K] bf16, w_mat [K, Cout] bf16, shift [1, Cout] f32 -> [M, Cout]."""
    M, K = patches.shape
    Cout = w_mat.shape[1]
    tm = min(tile_m, _round_up(M, 8))
    Mp = _round_up(M, tm)
    if Mp != M:
        patches = jnp.pad(patches, ((0, Mp - M), (0, 0)))

    out = pl.pallas_call(
        conv_bn_relu_kernel,
        out_shape=jax.ShapeDtypeStruct((Mp, Cout), out_dtype),
        grid=(Mp // tm,),
        in_specs=[
            pl.BlockSpec((tm, K), lambda i: (i, 0)),       # row tile (pipelined)
            pl.BlockSpec((K, Cout), lambda i: (0, 0)),     # weights, resident
            pl.BlockSpec((1, Cout), lambda i: (0, 0)),     # shift, resident
        ],
        out_specs=pl.BlockSpec((tm, Cout), lambda i: (i, 0)),
        compiler_params=pltpu.CompilerParams(
            dimension_semantics=("parallel",),
            vmem_limit_bytes=_VMEM_LIMIT_BYTES),
    )(patches, w_mat, shift)
    return out[:M]


# ---------------------------------------------------------------------------
# Kernel 2: Conv(4,2,1)+BN+ReLU fused with AdaptiveAvgPool2d(1) + 1x1 conv +
# Sigmoid.  Grid = (batch, spatial tiles); spatial axis is a reduction.
# ---------------------------------------------------------------------------
def _stage2_head_kernel(p_ref, w_ref, shift_ref, w3_ref, b3_ref, o_ref, acc_ref,
                        *, s_valid, tile_s):
    s = pl.program_id(1)

    @pl.when(s == 0)
    def _():
        acc_ref[...] = jnp.zeros_like(acc_ref)

    # Conv-as-matmul on this spatial tile of one sample.
    y = jnp.dot(p_ref[0], w_ref[...], preferred_element_type=jnp.float32)
    y = jnp.maximum(y + shift_ref[...], 0.0)               # [tile_s, C] f32

    # Mask padded spatial rows (relu(shift) of zero-padded patches is nonzero).
    if s_valid % tile_s != 0:
        row = s * tile_s + lax.broadcasted_iota(jnp.int32, y.shape, 0)
        y = jnp.where(row < s_valid, y, 0.0)

    acc_ref[...] += jnp.sum(y, axis=0, keepdims=True)      # [1, C] channel sums

    @pl.when(s == pl.num_programs(1) - 1)
    def _():
        pooled = acc_ref[...] * (1.0 / s_valid)                         # [1, C]
        # 1x1 conv (C -> 1) as VPU multiply + lane reduction (no 1-wide MXU).
        logit = jnp.sum(pooled * w3_ref[...], axis=-1, keepdims=True)   # [1, 1]
        prob = jax.nn.sigmoid(logit + b3_ref[...])                      # [1, 1]
        # Lane/sublane-dense output tile; host slices [:, 0, :1].
        o_ref[...] = jnp.broadcast_to(prob.reshape(1, 1, 1),
                                      (1, 8, 128)).astype(o_ref.dtype)


def conv_bn_relu_pool_head(patches, w_mat, shift, w3_row, b3, *, tile_s=512):
    """patches [N, S, K] bf16, w_mat [K, C] bf16, shift [1, C] f32,
    w3_row [1, C] f32, b3 [1, 1] f32 -> [N, 1] sigmoid probabilities."""
    N, S, K = patches.shape
    C = w_mat.shape[1]
    ts = min(tile_s, _round_up(S, 8))
    Sp = _round_up(S, ts)
    if Sp != S:
        patches = jnp.pad(patches, ((0, 0), (0, Sp - S), (0, 0)))

    kernel = functools.partial(_stage2_head_kernel, s_valid=S, tile_s=ts)
    out = pl.pallas_call(
        kernel,
        out_shape=jax.ShapeDtypeStruct((N, 8, 128), jnp.float32),
        grid=(N, Sp // ts),
        in_specs=[
            pl.BlockSpec((1, ts, K), lambda n, s: (n, s, 0)),   # patch tile
            pl.BlockSpec((K, C), lambda n, s: (0, 0)),          # conv2 weights
            pl.BlockSpec((1, C), lambda n, s: (0, 0)),          # folded shift
            pl.BlockSpec((1, C), lambda n, s: (0, 0)),          # 1x1 conv weight
            pl.BlockSpec((1, 1), lambda n, s: (0, 0)),          # 1x1 conv bias
        ],
        out_specs=pl.BlockSpec((1, 8, 128), lambda n, s: (n, 0, 0)),
        scratch_shapes=[pltpu.VMEM((1, C), jnp.float32)],       # channel-sum acc
        compiler_params=pltpu.CompilerParams(
            dimension_semantics=("parallel", "arbitrary"),
            vmem_limit_bytes=_VMEM_LIMIT_BYTES),
    )(patches, w_mat, shift, w3_row, b3)
    return out[:, 0, :1]                                        # [N, 1]


# ---------------------------------------------------------------------------
# Host-side glue: im2col, conv-bias + BatchNorm folding, parameter init.
# ---------------------------------------------------------------------------
def im2col(x_nhwc, k=4, s=2, p=1):
    """x_nhwc: [N, H, W, C] -> patches [N, Ho, Wo, k*k*C] ordered (kh, kw, c)."""
    N, H, W, C = x_nhwc.shape
    xp = jnp.pad(x_nhwc, ((0, 0), (p, p), (p, p), (0, 0)))
    Ho = (H + 2 * p - k) // s + 1
    Wo = (W + 2 * p - k) // s + 1
    cols = []
    for di in range(k):
        for dj in range(k):
            cols.append(xp[:, di:di + Ho * s:s, dj:dj + Wo * s:s, :])
    patches = jnp.stack(cols, axis=-2)                 # [N, Ho, Wo, k*k, C]
    return patches.reshape(N, Ho, Wo, k * k * C), Ho, Wo


def fold_conv_bn(w, b, gamma, beta, rmean, rvar, eps=BN_EPS):
    """Fold conv bias + eval-mode BN into (bf16 weight matrix, f32 shift).

    y = ((x@W + b) - mean) * scale + beta = x @ (W*scale) + (b - mean)*scale + beta
    """
    Cout, Cin, kh, kw = w.shape
    w_mat = jnp.transpose(w, (2, 3, 1, 0)).reshape(kh * kw * Cin, Cout)
    scale = gamma / jnp.sqrt(rvar + eps)
    w_folded = (w_mat * scale[None, :]).astype(jnp.bfloat16)
    shift = ((b - rmean) * scale + beta).reshape(1, Cout).astype(jnp.float32)
    return w_folded, shift


def init_params(key, img_channels=1):
    ks = jax.random.split(key, 12)
    p = {
        # Conv2d(img_channels, 64, 4, 2, 1)
        "w1": jax.random.normal(ks[0], (64, img_channels, 4, 4), jnp.float32) * 0.05,
        "b1": jax.random.normal(ks[1], (64,), jnp.float32) * 0.01,
        # BatchNorm2d(64) -- eval-mode running stats
        "g1": 1.0 + 0.1 * jax.random.normal(ks[2], (64,), jnp.float32),
        "be1": 0.1 * jax.random.normal(ks[3], (64,), jnp.float32),
        "rm1": 0.05 * jax.random.normal(ks[4], (64,), jnp.float32),
        "rv1": 1.0 + 0.1 * jnp.abs(jax.random.normal(ks[5], (64,), jnp.float32)),
        # Conv2d(64, 128, 4, 2, 1)
        "w2": jax.random.normal(ks[6], (128, 64, 4, 4), jnp.float32) * 0.02,
        "b2": jax.random.normal(ks[7], (128,), jnp.float32) * 0.01,
        # BatchNorm2d(128)
        "g2": 1.0 + 0.1 * jax.random.normal(ks[8], (128,), jnp.float32),
        "be2": 0.1 * jax.random.normal(ks[9], (128,), jnp.float32),
        "rm2": 0.05 * jax.random.normal(ks[10], (128,), jnp.float32),
        "rv2": 1.0 + 0.1 * jnp.abs(jax.random.normal(ks[11], (128,), jnp.float32)),
        # Conv2d(128, 1, 1)
        "w3": jax.random.normal(jax.random.fold_in(key, 99), (1, 128, 1, 1),
                                jnp.float32) * 0.05,
        "b3": jnp.array([0.02], jnp.float32),
    }
    return p


def discriminator_forward(params, x_nchw):
    """x_nchw: [N, C_in, H, W] float32 -> [N, 1] sigmoid probabilities."""
    x = jnp.transpose(x_nchw, (0, 2, 3, 1)).astype(jnp.bfloat16)  # NCHW -> NHWC bf16
    N = x.shape[0]

    w1m, shift1 = fold_conv_bn(params["w1"], params["b1"], params["g1"],
                               params["be1"], params["rm1"], params["rv1"])
    w2m, shift2 = fold_conv_bn(params["w2"], params["b2"], params["g2"],
                               params["be2"], params["rm2"], params["rv2"])
    w3_row = params["w3"].reshape(1, 128).astype(jnp.float32)
    b3 = params["b3"].reshape(1, 1).astype(jnp.float32)

    # ---- stage 1: Conv(4,2,1) + BN + ReLU  (Dropout = eval-mode identity)
    patches1, H1, W1 = im2col(x, k=4, s=2, p=1)
    p1 = patches1.reshape(N * H1 * W1, -1)                    # bf16 [M1, 16*Cin]
    y1 = conv_bn_relu(p1, w1m, shift1)                        # bf16 [M1, 64]
    y1 = y1.reshape(N, H1, W1, 64)

    # ---- stage 2: Conv(4,2,1) + BN + ReLU + avg-pool + 1x1 conv + sigmoid
    patches2, H2, W2 = im2col(y1, k=4, s=2, p=1)              # bf16
    p2 = patches2.reshape(N, H2 * W2, -1)                     # bf16 [N, S2, 1024]
    return conv_bn_relu_pool_head(p2, w2m, shift2, w3_row, b3)  # [N, 1]


# ---------------------------------------------------------------------------
# Pure-JAX reference (eval-mode) for a sanity check.
# ---------------------------------------------------------------------------
def _reference_forward(params, x_nchw):
    x = jnp.transpose(x_nchw, (0, 2, 3, 1))

    def conv(x, w, b):
        y = lax.conv_general_dilated(
            x, jnp.transpose(w, (2, 3, 1, 0)), window_strides=(2, 2),
            padding=((1, 1), (1, 1)),
            dimension_numbers=("NHWC", "HWIO", "NHWC"))
        return y + b

    def bn(y, g, be, rm, rv):
        return (y - rm) / jnp.sqrt(rv + BN_EPS) * g + be

    y = jax.nn.relu(bn(conv(x, params["w1"], params["b1"]),
                       params["g1"], params["be1"], params["rm1"], params["rv1"]))
    y = jax.nn.relu(bn(conv(y, params["w2"], params["b2"]),
                       params["g2"], params["be2"], params["rm2"], params["rv2"]))
    pooled = jnp.mean(y, axis=(1, 2))                                  # [N, 128]
    logit = pooled @ params["w3"].reshape(1, 128).T + params["b3"]     # [N, 1]
    return jax.nn.sigmoid(logit)


if __name__ == "__main__":
    key = jax.random.PRNGKey(0)
    k_params, k_x = jax.random.split(key)

    img_channels = 1
    x = jax.random.normal(k_x, (2, img_channels, 16, 16), jnp.float32)  # NCHW
    params = init_params(k_params, img_channels=img_channels)

    out = jax.jit(discriminator_forward)(params, x)
    out = jax.block_until_ready(out)

    assert out.shape == (2, 1), out.shape
    assert bool(jnp.all((out >= 0.0) & (out <= 1.0)))

    ref = _reference_forward(params, x)
    max_err = float(jnp.max(jnp.abs(out - ref)))
    assert max_err < 5e-2, f"max abs diff vs reference: {max_err}"
    print("KERNEL_OK")
</pallas_src>

<mosaic_0001>
module attributes {stable_mosaic.version = 11 : i64} {
  func.func @conv_bn_relu_kernel(%arg0: i32, %arg1: memref<128x16xbf16, #tpu.memory_space<vmem>>, %arg2: memref<16x64xbf16, #tpu.memory_space<vmem>>, %arg3: memref<1x64xf32, #tpu.memory_space<vmem>>, %arg4: memref<128x64xbf16, #tpu.memory_space<vmem>>) attributes {dimension_semantics = [#tpu.dimension_semantics<parallel>], iteration_bounds = array<i64: 1>, scalar_prefetch = 0 : i64, scratch_operands = 0 : i64, tpu.core_type = #tpu.core_type<tc>, window_params = [{transform_indices = @transform_0, window_bounds = array<i64: 128, 16>}, {pipeline_mode = #tpu.pipeline_mode<synchronous>, transform_indices = @transform_1, window_bounds = array<i64: 16, 64>}, {pipeline_mode = #tpu.pipeline_mode<synchronous>, transform_indices = @transform_2, window_bounds = array<i64: 1, 64>}, {transform_indices = @transform_3, window_bounds = array<i64: 128, 64>}]} {
    %c0 = arith.constant 0 : index
    %c0_0 = arith.constant 0 : index
    %0 = vector.load %arg1[%c0, %c0_0] : memref<128x16xbf16, #tpu.memory_space<vmem>>, vector<128x16xbf16>
    %c0_1 = arith.constant 0 : index
    %c0_2 = arith.constant 0 : index
    %1 = vector.load %arg2[%c0_1, %c0_2] : memref<16x64xbf16, #tpu.memory_space<vmem>>, vector<16x64xbf16>
    %cst = arith.constant dense<0.000000e+00> : vector<128x64xf32>
    %2 = tpu.matmul %0, %1, %cst {dimension_numbers = #tpu.dot_dimension_numbers<[1], [0], [0], [1], [0, 0, 1, 1], [], []>} : vector<128x16xbf16>, vector<16x64xbf16>, vector<128x64xf32> -> vector<128x64xf32>
    %c0_3 = arith.constant 0 : index
    %c0_4 = arith.constant 0 : index
    %3 = vector.load %arg3[%c0_3, %c0_4] : memref<1x64xf32, #tpu.memory_space<vmem>>, vector<1x64xf32>
    %4 = vector.broadcast %3 : vector<1x64xf32> to vector<128x64xf32>
    %5 = arith.addf %2, %4 : vector<128x64xf32>
    %cst_5 = arith.constant 0.000000e+00 : f32
    %6 = vector.broadcast %cst_5 : f32 to vector<128x64xf32>
    %7 = arith.maximumf %5, %6 : vector<128x64xf32>
    %8 = arith.truncf %7 : vector<128x64xf32> to vector<128x64xbf16>
    %c0_6 = arith.constant 0 : index
    %c0_7 = arith.constant 0 : index
    %9 = vector.load %arg4[%c0_6, %c0_7] : memref<128x64xbf16, #tpu.memory_space<vmem>>, vector<128x64xbf16>
    tpu.vector_store %arg4[%c0_6, %c0_7], %8 {strides = array<i32>} : memref<128x64xbf16, #tpu.memory_space<vmem>>, vector<128x64xbf16>,
    return
  }
  func.func @transform_0(%arg0: i32) -> (i32, i32) {
    %c0_i32 = arith.constant 0 : i32
    %c0_i32_0 = arith.constant 0 : i32
    return %arg0, %c0_i32 : i32, i32
  }
  func.func @transform_1(%arg0: i32) -> (i32, i32) {
    %c0_i32 = arith.constant 0 : i32
    %c0_i32_0 = arith.constant 0 : i32
    %c0_i32_1 = arith.constant 0 : i32
    return %c0_i32, %c0_i32_0 : i32, i32
  }
  func.func @transform_2(%arg0: i32) -> (i32, i32) {
    %c0_i32 = arith.constant 0 : i32
    %c0_i32_0 = arith.constant 0 : i32
    %c0_i32_1 = arith.constant 0 : i32
    return %c0_i32, %c0_i32_0 : i32, i32
  }
  func.func @transform_3(%arg0: i32) -> (i32, i32) {
    %c0_i32 = arith.constant 0 : i32
    %c0_i32_0 = arith.constant 0 : i32
    return %arg0, %c0_i32 : i32, i32
  }
}

module attributes {stable_mosaic.version = 11 : i64} {
  func.func @_stage2_head_kernel(%arg0: i32, %arg1: i32, %arg2: memref<1x16x1024xbf16, #tpu.memory_space<vmem>>, %arg3: memref<1024x128xbf16, #tpu.memory_space<vmem>>, %arg4: memref<1x128xf32, #tpu.memory_space<vmem>>, %arg5: memref<1x128xf32, #tpu.memory_space<vmem>>, %arg6: memref<1x1xf32, #tpu.memory_space<vmem>>, %arg7: memref<1x8x128xf32, #tpu.memory_space<vmem>>, %arg8: memref<1x128xf32, #tpu.memory_space<vmem>>) attributes {dimension_semantics = [#tpu.dimension_semantics<parallel>, #tpu.dimension_semantics<arbitrary>], iteration_bounds = array<i64: 2, 1>, scalar_prefetch = 0 : i64, scratch_operands = 1 : i64, tpu.core_type = #tpu.core_type<tc>, window_params = [{transform_indices = @transform_0, window_bounds = array<i64: 1, 16, 1024>}, {pipeline_mode = #tpu.pipeline_mode<synchronous>, transform_indices = @transform_1, window_bounds = array<i64: 1024, 128>}, {pipeline_mode = #tpu.pipeline_mode<synchronous>, transform_indices = @transform_2, window_bounds = array<i64: 1, 128>}, {pipeline_mode = #tpu.pipeline_mode<synchronous>, transform_indices = @transform_3, window_bounds = array<i64: 1, 128>}, {pipeline_mode = #tpu.pipeline_mode<synchronous>, transform_indices = @transform_4, window_bounds = array<i64: 1, 1>}, {transform_indices = @transform_5, window_bounds = array<i64: 1, 8, 128>}]} {
    %c0_i32 = arith.constant 0 : i32
    %0 = arith.cmpi eq, %arg1, %c0_i32 : i32
    %1 = arith.extui %0 : i1 to i32
    %c0_i32_0 = arith.constant 0 : i32
    %2 = arith.cmpi ne, %1, %c0_i32_0 : i32
    scf.if %2 {
      %cst_15 = arith.constant 0.000000e+00 : f32
      %20 = vector.broadcast %cst_15 : f32 to vector<1x128xf32>
      %c0_16 = arith.constant 0 : index
      %c0_17 = arith.constant 0 : index
      %21 = vector.load %arg8[%c0_16, %c0_17] : memref<1x128xf32, #tpu.memory_space<vmem>>, vector<1x128xf32>
      tpu.vector_store %arg8[%c0_16, %c0_17], %20 {strides = array<i32>} : memref<1x128xf32, #tpu.memory_space<vmem>>, vector<1x128xf32>,
    } else {
    }
    %c0 = arith.constant 0 : index
    %c0_1 = arith.constant 0 : index
    %c0_2 = arith.constant 0 : index
    %3 = vector.load %arg2[%c0, %c0_1, %c0_2] : memref<1x16x1024xbf16, #tpu.memory_space<vmem>>, vector<1x16x1024xbf16>
    %4 = vector.shape_cast %3 : vector<1x16x1024xbf16> to vector<16x1024xbf16>
    %c0_3 = arith.constant 0 : index
    %c0_4 = arith.constant 0 : index
    %5 = vector.load %arg3[%c0_3, %c0_4] : memref<1024x128xbf16, #tpu.memory_space<vmem>>, vector<1024x128xbf16>
    %cst = arith.constant dense<0.000000e+00> : vector<16x128xf32>
    %6 = tpu.matmul %4, %5, %cst {dimension_numbers = #tpu.dot_dimension_numbers<[1], [0], [0], [1], [0, 0, 1, 1], [], []>} : vector<16x1024xbf16>, vector<1024x128xbf16>, vector<16x128xf32> -> vector<16x128xf32>
    %c0_5 = arith.constant 0 : index
    %c0_6 = arith.constant 0 : index
    %7 = vector.load %arg4[%c0_5, %c0_6] : memref<1x128xf32, #tpu.memory_space<vmem>>, vector<1x128xf32>
    %8 = vector.broadcast %7 : vector<1x128xf32> to vector<16x128xf32>
    %9 = arith.addf %6, %8 : vector<16x128xf32>
    %cst_7 = arith.constant 0.000000e+00 : f32
    %10 = vector.broadcast %cst_7 : f32 to vector<16x128xf32>
    %11 = arith.maximumf %9, %10 : vector<16x128xf32>
    %c0_8 = arith.constant 0 : index
    %c0_9 = arith.constant 0 : index
    %12 = vector.load %arg8[%c0_8, %c0_9] : memref<1x128xf32, #tpu.memory_space<vmem>>, vector<1x128xf32>
    %cst_10 = arith.constant dense<0.000000e+00> : vector<128xf32>
    %13 = vector.multi_reduction <add>, %11, %cst_10 [0] : vector<16x128xf32> to vector<128xf32>
    %14 = vector.shape_cast %13 : vector<128xf32> to vector<1x128xf32>
    %15 = arith.addf %12, %14 : vector<1x128xf32>
    %c0_11 = arith.constant 0 : index
    %c0_12 = arith.constant 0 : index
    %16 = vector.load %arg8[%c0_11, %c0_12] : memref<1x128xf32, #tpu.memory_space<vmem>>, vector<1x128xf32>
    tpu.vector_store %arg8[%c0_11, %c0_12], %15 {strides = array<i32>} : memref<1x128xf32, #tpu.memory_space<vmem>>, vector<1x128xf32>,
    %c0_i32_13 = arith.constant 0 : i32
    %17 = arith.cmpi eq, %arg1, %c0_i32_13 : i32
    %18 = arith.extui %17 : i1 to i32
    %c0_i32_14 = arith.constant 0 : i32
    %19 = arith.cmpi ne, %18, %c0_i32_14 : i32
    scf.if %19 {
      %c0_15 = arith.constant 0 : index
      %c0_16 = arith.constant 0 : index
      %20 = vector.load %arg8[%c0_15, %c0_16] : memref<1x128xf32, #tpu.memory_space<vmem>>, vector<1x128xf32>
      %cst_17 = arith.constant 6.250000e-02 : f32
      %21 = vector.broadcast %cst_17 : f32 to vector<1x128xf32>
      %22 = arith.mulf %20, %21 : vector<1x128xf32>
      %c0_18 = arith.constant 0 : index
      %c0_19 = arith.constant 0 : index
      %23 = vector.load %arg5[%c0_18, %c0_19] : memref<1x128xf32, #tpu.memory_space<vmem>>, vector<1x128xf32>
      %24 = arith.mulf %22, %23 : vector<1x128xf32>
      %cst_20 = arith.constant dense<0.000000e+00> : vector<1xf32>
      %25 = vector.multi_reduction <add>, %24, %cst_20 [1] : vector<1x128xf32> to vector<1xf32>
      %26 = vector.shape_cast %25 : vector<1xf32> to vector<1x1xf32>
      %c0_21 = arith.constant 0 : index
      %c0_22 = arith.constant 0 : index
      %27 = vector.load %arg6[%c0_21, %c0_22] : memref<1x1xf32, #tpu.memory_space<vmem>>, vector<1x1xf32>
      %28 = arith.addf %26, %27 : vector<1x1xf32>
      %29 = arith.negf %28 : vector<1x1xf32>
      %30 = math.exp %29 : vector<1x1xf32>
      %cst_23 = arith.constant 1.000000e+00 : f32
      %31 = vector.broadcast %cst_23 : f32 to vector<1x1xf32>
      %32 = arith.addf %31, %30 : vector<1x1xf32>
      %33 = arith.divf %31, %32 : vector<1x1xf32>
      %34 = vector.shape_cast %33 : vector<1x1xf32> to vector<1x1x1xf32>
      %35 = vector.shape_cast %34 : vector<1x1x1xf32> to vector<1x1x1xf32>
      %36 = vector.broadcast %35 : vector<1x1x1xf32> to vector<1x8x128xf32>
      %c0_24 = arith.constant 0 : index
      %c0_25 = arith.constant 0 : index
      %c0_26 = arith.constant 0 : index
      %37 = vector.load %arg7[%c0_24, %c0_25, %c0_26] : memref<1x8x128xf32, #tpu.memory_space<vmem>>, vector<1x8x128xf32>
      tpu.vector_store %arg7[%c0_24, %c0_25, %c0_26], %36 {strides = array<i32>} : memref<1x8x128xf32, #tpu.memory_space<vmem>>, vector<1x8x128xf32>,
    } else {
    }
    return
  }
  func.func @transform_0(%arg0: i32, %arg1: i32) -> (i32, i32, i32) {
    %c0_i32 = arith.constant 0 : i32
    %c0_i32_0 = arith.constant 0 : i32
    return %arg0, %arg1, %c0_i32 : i32, i32, i32
  }
  func.func @transform_1(%arg0: i32, %arg1: i32) -> (i32, i32) {
    %c0_i32 = arith.constant 0 : i32
    %c0_i32_0 = arith.constant 0 : i32
    %c0_i32_1 = arith.constant 0 : i32
    return %c0_i32, %c0_i32_0 : i32, i32
  }
  func.func @transform_2(%arg0: i32, %arg1: i32) -> (i32, i32) {
    %c0_i32 = arith.constant 0 : i32
    %c0_i32_0 = arith.constant 0 : i32
    %c0_i32_1 = arith.constant 0 : i32
    return %c0_i32, %c0_i32_0 : i32, i32
  }
  func.func @transform_3(%arg0: i32, %arg1: i32) -> (i32, i32) {
    %c0_i32 = arith.constant 0 : i32
    %c0_i32_0 = arith.constant 0 : i32
    %c0_i32_1 = arith.constant 0 : i32
    return %c0_i32, %c0_i32_0 : i32, i32
  }
  func.func @transform_4(%arg0: i32, %arg1: i32) -> (i32, i32) {
    %c0_i32 = arith.constant 0 : i32
    %c0_i32_0 = arith.constant 0 : i32
    %c0_i32_1 = arith.constant 0 : i32
    return %c0_i32, %c0_i32_0 : i32, i32
  }
  func.func @transform_5(%arg0: i32, %arg1: i32) -> (i32, i32, i32) {
    %c0_i32 = arith.constant 0 : i32
    %c0_i32_0 = arith.constant 0 : i32
    %c0_i32_1 = arith.constant 0 : i32
    return %arg0, %c0_i32, %c0_i32_0 : i32, i32, i32
  }
}

</mosaic_0001>

<llo_original>
// kernel: discriminator_forward.2
$region0: #{discriminator_forward.2}
  #allocation0 [shape = 'u32[]', space=smem, size = 0x4, offset = 0x4, fixed_abs, tag = 'smem constant byte address 0x4 - core index']
  #allocation1 [shape = 'u32[144,128]{1,0:T(1,128)}', space=vmem, size = 0x12000, scoped, tag = 'internal scratch']
  %s0 = inlined_call_operand.vmem [shape: bf16[128,16], index: 0, kind: input, shape index: {}]
  %s1 = inlined_call_operand.vmem [shape: bf16[16,64], index: 1, kind: input, shape index: {}]
  %s2 = inlined_call_operand.vmem [shape: f32[1,64], index: 2, kind: input, shape index: {}]
  %s3 = inlined_call_operand.vmem [shape: bf16[128,64], index: 3, kind: output, shape index: {}]
  %s4 = sld [smem:[#allocation0]]
  $region22: #{discriminator_forward.2} parent=0
    _
  %s6 = ssub.s32 1, %s4
  %s7 = scalar_select 0, %s6, %s4
  // Predicated region
  $region2: #{discriminator_forward.2} parent=0 // pred_check
    _
  $region3: #{discriminator_forward.2} parent=0 // pred_check_branch
    %9 = sbr.rel (0) target = $region5
  $region4: #{discriminator_forward.2} parent=0 // pred_region
    _
  $region5: #{discriminator_forward.2} parent=0 // pred_fallthru
    _
  // Predicated region
  $region6: #{discriminator_forward.2} parent=0 // pred_check
    _
  $region7: #{discriminator_forward.2} parent=0 // pred_check_branch
    %11 = sbr.rel (0) target = $region9
  $region8: #{discriminator_forward.2} parent=0 // pred_region
    _
  $region9: #{discriminator_forward.2} parent=0 // pred_fallthru
    _
  // Predicated region
  $region10: #{discriminator_forward.2} parent=0 // pred_check
    _
  $region11: #{discriminator_forward.2} parent=0 // pred_check_branch
    %13 = sbr.rel (0) target = $region13
  $region12: #{discriminator_forward.2} parent=0 // pred_region
    _
  $region13: #{discriminator_forward.2} parent=0 // pred_fallthru
    _
  %v15 = vld [vmem:[%s0] sm:$0xf]
  %v16 = vld [vmem:[%s0 + $0x4] sm:$0xf]
  %v17 = vld [vmem:[%s0 + $0x8] sm:$0xf]
  %v18 = vld [vmem:[%s0 + $0xc] sm:$0xf]
  %v19 = vld [vmem:[%s0 + $0x10] sm:$0xf]
  %v20 = vld [vmem:[%s0 + $0x14] sm:$0xf]
  %v21 = vld [vmem:[%s0 + $0x18] sm:$0xf]
  %v22 = vld [vmem:[%s0 + $0x1c] sm:$0xf]
  %v23 = vld [vmem:[%s0 + $0x20] sm:$0xf]
  %v24 = vld [vmem:[%s0 + $0x24] sm:$0xf]
  %v25 = vld [vmem:[%s0 + $0x28] sm:$0xf]
  %v26 = vld [vmem:[%s0 + $0x2c] sm:$0xf]
  %v27 = vld [vmem:[%s0 + $0x30] sm:$0xf]
  %v28 = vld [vmem:[%s0 + $0x34] sm:$0xf]
  %v29 = vld [vmem:[%s0 + $0x38] sm:$0xf]
  %v30 = vld [vmem:[%s0 + $0x3c] sm:$0xf]
  %v31 = vld [vmem:[%s1] sm:$0xf]
  %v32 = vld [vmem:[%s1 + $0x4] sm:$0xf]
  %v33 = vld [vmem:[%s2] sm:$0x1]
  %v35 = vlaneseq
  %v36 = vshrl.u32 %v35, 7
  %v37 = vsub.s32 0, %v36
  %v38 = vrot.slane %v33, %v37
  %v56 = vunpack.c.l.b16 %v15
  %v57 = vunpack.c.l.b16 %v16
  %v58 = vunpack.c.l.b16 %v17
  %v59 = vunpack.c.l.b16 %v18
  %v60 = vunpack.c.l.b16 %v19
  %v61 = vunpack.c.l.b16 %v20
  %v62 = vunpack.c.l.b16 %v21
  %v63 = vunpack.c.l.b16 %v22
  %v64 = vunpack.c.l.b16 %v23
  %v65 = vunpack.c.l.b16 %v24
  %v66 = vunpack.c.l.b16 %v25
  %v67 = vunpack.c.l.b16 %v26
  %v68 = vunpack.c.l.b16 %v27
  %v69 = vunpack.c.l.b16 %v28
  %v70 = vunpack.c.l.b16 %v29
  %v71 = vunpack.c.l.b16 %v30
  %v72 = vpack.c.b16 %v57, %v56
  %v73 = vpack.c.b16 %v59, %v58
  %v74 = vpack.c.b16 %v61, %v60
  %v75 = vpack.c.b16 %v63, %v62
  %v76 = vpack.c.b16 %v65, %v64
  %v77 = vpack.c.b16 %v67, %v66
  %v78 = vpack.c.b16 %v69, %v68
  %v79 = vpack.c.b16 %v71, %v70
  %v82 = vunpack.c.l.b16 %v31
  %v83 = vunpack.c.l.b16 %v32
  %v84 = vpack.c.b16 %v83, %v82
  %vm86 = vcmask 130048
  %v88 = vsel %vm86, %v72, 0
  %v91 = vsel %vm86, %v73, 0
  %v94 = vsel %vm86, %v74, 0
  %v97 = vsel %vm86, %v75, 0
  %v100 = vsel %vm86, %v76, 0
  %v103 = vsel %vm86, %v77, 0
  %v106 = vsel %vm86, %v78, 0
  %v109 = vsel %vm86, %v79, 0
  %111 = vmatprep.subr.bf16.mxu0 0
  %112 = vmatpush1.bf16.msra.mxu0 %v84
  %113 = vmatprep.subr.bf16.mxu0 0
  %114 = vmatpush1.bf16.msra.mxu0 0
  %115 = vmatprep.subr.bf16.mxu0 0
  %116 = vmatpush1.bf16.msra.mxu0 0
  %117 = vmatprep.subr.bf16.mxu0 0
  %118 = vmatpush1.bf16.msra.mxu0 0
  %119 = vmatprep.subr.bf16.mxu0 0
  %120 = vmatpush1.bf16.msra.mxu0 0
  %121 = vmatprep.subr.bf16.mxu0 0
  %122 = vmatpush1.bf16.msra.mxu0 0
  %123 = vmatprep.subr.bf16.mxu0 0
  %124 = vmatpush1.bf16.msra.mxu0 0
  %125 = vmatprep.subr.bf16.mxu0 0
  %126 = vmatpush1.bf16.msra.mxu0 0
  %127 = vmatprep.subr.bf16.mxu0 0
  %128 = vmatpush1.bf16.msra.mxu0 0
  %129 = vmatprep.subr.bf16.mxu0 0
  %130 = vmatpush1.bf16.msra.mxu0 0
  %131 = vmatprep.subr.bf16.mxu0 0
  %132 = vmatpush1.bf16.msra.mxu0 0
  %133 = vmatprep.subr.bf16.mxu0 0
  %134 = vmatpush1.bf16.msra.mxu0 0
  %135 = vmatprep.subr.bf16.mxu0 0
  %136 = vmatpush1.bf16.msra.mxu0 0
  %137 = vmatprep.subr.bf16.mxu0 0
  %138 = vmatpush1.bf16.msra.mxu0 0
  %139 = vmatprep.subr.bf16.mxu0 0
  %140 = vmatpush1.bf16.msra.mxu0 0
  %141 = vmatprep.subr.bf16.mxu0 0
  %142 = vmatpush1.bf16.msra.mxu0 0
  %143 = vmatprep.mubr.bf16.mxu0 0
  %144 = vmatmul.mubr.bf16.gmra.mrb[0].mxu0 %v88
  %v145 = vpop.f32.mrb[0].mxu0
  %v146 = vadd.f32 %v38, %v145
  %v147 = vpop.f32.mrb[0].mxu0
  %v148 = vpop.f32.mrb[0].mxu0
  %v149 = vadd.f32 %v38, %v148
  %v150 = vpop.f32.mrb[0].mxu0
  %151 = vmatprep.mubr.bf16.mxu0 0
  %152 = vmatmul.mubr.bf16.gmra.mrb[0].mxu0 %v91
  %v153 = vpop.f32.mrb[0].mxu0
  %v154 = vadd.f32 %v38, %v153
  %v155 = vpop.f32.mrb[0].mxu0
  %v156 = vpop.f32.mrb[0].mxu0
  %v157 = vadd.f32 %v38, %v156
  %v158 = vpop.f32.mrb[0].mxu0
  %159 = vmatprep.mubr.bf16.mxu0 0
  %160 = vmatmul.mubr.bf16.gmra.mrb[0].mxu0 %v94
  %v161 = vpop.f32.mrb[0].mxu0
  %v162 = vadd.f32 %v38, %v161
  %v163 = vpop.f32.mrb[0].mxu0
  %v164 = vpop.f32.mrb[0].mxu0
  %v165 = vadd.f32 %v38, %v164
  %v166 = vpop.f32.mrb[0].mxu0
  %167 = vmatprep.mubr.bf16.mxu0 0
  %168 = vmatmul.mubr.bf16.gmra.mrb[0].mxu0 %v97
  %v169 = vpop.f32.mrb[0].mxu0
  %v170 = vadd.f32 %v38, %v169
  %v171 = vpop.f32.mrb[0].mxu0
  %v172 = vpop.f32.mrb[0].mxu0
  %v173 = vadd.f32 %v38, %v172
  %v174 = vpop.f32.mrb[0].mxu0
  %175 = vmatprep.mubr.bf16.mxu0 0
  %176 = vmatmul.mubr.bf16.gmra.mrb[0].mxu0 %v100
  %v177 = vpop.f32.mrb[0].mxu0
  %v178 = vadd.f32 %v38, %v177
  %v179 = vpop.f32.mrb[0].mxu0
  %v180 = vpop.f32.mrb[0].mxu0
  %v181 = vadd.f32 %v38, %v180
  %v182 = vpop.f32.mrb[0].mxu0
  %183 = vmatprep.mubr.bf16.mxu0 0
  %184 = vmatmul.mubr.bf16.gmra.mrb[0].mxu0 %v103
  %v185 = vpop.f32.mrb[0].mxu0
  %v186 = vadd.f32 %v38, %v185
  %v187 = vpop.f32.mrb[0].mxu0
  %v188 = vpop.f32.mrb[0].mxu0
  %v189 = vadd.f32 %v38, %v188
  %v190 = vpop.f32.mrb[0].mxu0
  %191 = vmatprep.mubr.bf16.mxu0 0
  %192 = vmatmul.mubr.bf16.gmra.mrb[0].mxu0 %v106
  %v193 = vpop.f32.mrb[0].mxu0
  %v194 = vadd.f32 %v38, %v193
  %v195 = vpop.f32.mrb[0].mxu0
  %v196 = vpop.f32.mrb[0].mxu0
  %v197 = vadd.f32 %v38, %v196
  %v198 = vpop.f32.mrb[0].mxu0
  %199 = vmatprep.mubr.bf16.mxu0 0
  %200 = vmatmul.mubr.bf16.gmra.mrb[0].mxu0 %v109
  %v201 = vpop.f32.mrb[0].mxu0
  %v202 = vadd.f32 %v38, %v201
  %v203 = vpop.f32.mrb[0].mxu0
  %v204 = vpop.f32.mrb[0].mxu0
  %v205 = vadd.f32 %v38, %v204
  %v206 = vpop.f32.mrb[0].mxu0
  %207 = vdwg.mxu0
  %v208 = vmax.f32 %v146, 0.0
  %v209 = vmax.f32 %v149, 0.0
  %v210 = vmax.f32 %v154, 0.0
  %v211 = vmax.f32 %v157, 0.0
  %v212 = vmax.f32 %v162, 0.0
  %v213 = vmax.f32 %v165, 0.0
  %v214 = vmax.f32 %v170, 0.0
  %v215 = vmax.f32 %v173, 0.0
  %v216 = vmax.f32 %v178, 0.0
  %v217 = vmax.f32 %v181, 0.0
  %v218 = vmax.f32 %v186, 0.0
  %v219 = vmax.f32 %v189, 0.0
  %v220 = vmax.f32 %v194, 0.0
  %v221 = vmax.f32 %v197, 0.0
  %v222 = vmax.f32 %v202, 0.0
  %v223 = vmax.f32 %v205, 0.0
  %v224 = vpack.c.bf16 %v209, %v208
  %v225 = vpack.c.bf16 %v211, %v210
  %v226 = vpack.c.bf16 %v213, %v212
  %v227 = vpack.c.bf16 %v215, %v214
  %v228 = vpack.c.bf16 %v217, %v216
  %v229 = vpack.c.bf16 %v219, %v218
  %v230 = vpack.c.bf16 %v221, %v220
  %v231 = vpack.c.bf16 %v223, %v222
  %v240 = vunpack.c.l.b16 %v224
  %v241 = vunpack.c.h.b16 %v224
  %v242 = vunpack.c.l.b16 %v225
  %v243 = vunpack.c.h.b16 %v225
  %v244 = vunpack.c.l.b16 %v226
  %v245 = vunpack.c.h.b16 %v226
  %v246 = vunpack.c.l.b16 %v227
  %v247 = vunpack.c.h.b16 %v227
  %v248 = vunpack.c.l.b16 %v228
  %v249 = vunpack.c.h.b16 %v228
  %v250 = vunpack.c.l.b16 %v229
  %v251 = vunpack.c.h.b16 %v229
  %v252 = vunpack.c.l.b16 %v230
  %v253 = vunpack.c.h.b16 %v230
  %v254 = vunpack.c.l.b16 %v231
  %v255 = vunpack.c.h.b16 %v231
  %v256 = vpack.c.b16 %v240, %v240
  %v257 = vpack.c.b16 %v241, %v241
  %v258 = vpack.c.b16 %v242, %v242
  %v259 = vpack.c.b16 %v243, %v243
  %v260 = vpack.c.b16 %v244, %v244
  %v261 = vpack.c.b16 %v245, %v245
  %v262 = vpack.c.b16 %v246, %v246
  %v263 = vpack.c.b16 %v247, %v247
  %v264 = vpack.c.b16 %v248, %v248
  %v265 = vpack.c.b16 %v249, %v249
  %v266 = vpack.c.b16 %v250, %v250
  %v267 = vpack.c.b16 %v251, %v251
  %v268 = vpack.c.b16 %v252, %v252
  %v269 = vpack.c.b16 %v253, %v253
  %v270 = vpack.c.b16 %v254, %v254
  %v271 = vpack.c.b16 %v255, %v255
  %vm288 = vcmask 519168
  %289 = vst.msk [vmem:[%s3] sm:$0xf] %vm288, %v256
  %290 = vst.msk [vmem:[%s3 + $0x4] sm:$0xf] %vm288, %v257
  %291 = vst.msk [vmem:[%s3 + $0x8] sm:$0xf] %vm288, %v258
  %292 = vst.msk [vmem:[%s3 + $0xc] sm:$0xf] %vm288, %v259
  %293 = vst.msk [vmem:[%s3 + $0x10] sm:$0xf] %vm288, %v260
  %294 = vst.msk [vmem:[%s3 + $0x14] sm:$0xf] %vm288, %v261
  %295 = vst.msk [vmem:[%s3 + $0x18] sm:$0xf] %vm288, %v262
  %296 = vst.msk [vmem:[%s3 + $0x1c] sm:$0xf] %vm288, %v263
  %297 = vst.msk [vmem:[%s3 + $0x20] sm:$0xf] %vm288, %v264
  %298 = vst.msk [vmem:[%s3 + $0x24] sm:$0xf] %vm288, %v265
  %299 = vst.msk [vmem:[%s3 + $0x28] sm:$0xf] %vm288, %v266
  %300 = vst.msk [vmem:[%s3 + $0x2c] sm:$0xf] %vm288, %v267
  %301 = vst.msk [vmem:[%s3 + $0x30] sm:$0xf] %vm288, %v268
  %302 = vst.msk [vmem:[%s3 + $0x34] sm:$0xf] %vm288, %v269
  %303 = vst.msk [vmem:[%s3 + $0x38] sm:$0xf] %vm288, %v270
  %304 = vst.msk [vmem:[%s3 + $0x3c] sm:$0xf] %vm288, %v271
  // Predicated region
  $region14: #{discriminator_forward.2} parent=0 // pred_check
    _
  $region15: #{discriminator_forward.2} parent=0 // pred_check_branch
    %306 = sbr.rel (0) target = $region17
  $region16: #{discriminator_forward.2} parent=0 // pred_region
    _
  $region17: #{discriminator_forward.2} parent=0 // pred_fallthru
    _
  // Predicated region
  $region18: #{discriminator_forward.2} parent=0 // pred_check
    _
  $region19: #{discriminator_forward.2} parent=0 // pred_check_branch
    %308 = sbr.rel (0) target = $region21
  $region20: #{discriminator_forward.2} parent=0 // pred_region
    _
  $region21: #{discriminator_forward.2} parent=0 // pred_fallthru
    _

// kernel: discriminator_forward.3
$region0: #{discriminator_forward.3}
  #allocation0 [shape = 'u32[]', space=smem, size = 0x4, offset = 0x4, fixed_abs, tag = 'smem constant byte address 0x4 - core index']
  #allocation1 [shape = 'u32[144,128]{1,0:T(1,128)}', space=vmem, size = 0x12000, scoped, tag = 'internal scratch']
  #allocation2 [shape = 'f32[1,128]{1,0:T(1,128)}', space=vmem, size = 0x200, scoped, tag = 'scratch operand']
  #allocation3 [shape = 'f32[1,1]{1,0:T(1,128)S(1)}', space=vmem, size = 0x200, scoped, tag = 'scoped memory for discriminator_forward.3']
  %s0 = inlined_call_operand.vmem [shape: bf16[2,16,1024], index: 0, kind: input, shape index: {}]
  %s1 = inlined_call_operand.vmem [shape: bf16[1024,128], index: 1, kind: input, shape index: {}]
  %s2 = inlined_call_operand.vmem [shape: f32[1,128], index: 2, kind: input, shape index: {}]
  %s3 = inlined_call_operand.vmem [shape: f32[1,128], index: 3, kind: input, shape index: {}]
  %s4 = inlined_call_operand.<no memory space> [shape: f32[1,1], index: 4, kind: input, shape index: {}]
  %s5 = inlined_call_operand.vmem [shape: f32[2,8,128], index: 5, kind: output, shape index: {}]
  %s6 = sld [smem:[#allocation0]]
  $region61: #{discriminator_forward.3} parent=0
    _
  %s8 = ssub.s32 1, %s6
  %s9 = scalar_select 0, %s8, %s6
  %v10 = vstv %s4
  %11 = vst [vmem:[#allocation3] sm:$0x1] %v10
  loop: start=0, step=1, limit=4
  $region2: #{discriminator_forward.3} parent=0 // loop_pre_header
    _
  $region3: #{discriminator_forward.3} parent=0 // loop_header
    %s13 = sphi 0, %s17
    %p14 = scmp.ge.s32.totalorder %s13, 4
    %s20 = sphi 0, %s32
    %s21 = sphi 0, %s28
    %s22 = sphi 0, %s20
    %s23 = sphi 0, %s21
    %s24 = sphi 0, %s22
    %s25 = sphi 0, %s23
    %s37 = sphi 0, %s39
    %s40 = sphi 0, %s37
    %s41 = sphi 0, %s40
    %s57 = sphi 0, %s41
    %s61 = sphi 0, %s61
    %s63 = sphi 0, %s61
    %s64 = sphi 0, %s63
    %s78 = sphi 0, %s64
    %s82 = sphi 0, %s82
    %s84 = sphi 0, %s82
    %s85 = sphi 0, %s84
    %s99 = sphi 0, %s85
    %s103 = sphi 0, %s103
    %s105 = sphi 0, %s103
    %s106 = sphi 0, %s105
    %s120 = sphi 0, %s106
    %s124 = sphi 0, %s124
    %s126 = sphi 0, %s124
    %s127 = sphi 0, %s126
    %s141 = sphi 0, %s127
    %s147 = sphi 0, %s149
    %s150 = sphi 0, %s147
    %s151 = sphi 0, %s150
    %s167 = sphi 0, %s151
  $region4: #{discriminator_forward.3} parent=0 // loop_header_branch
    %16 = sbr.rel (%p14) target = $region8
  $region5: #{discriminator_forward.3} parent=0 // loop_body
    %s18 = ssub.s32 %s13, 1
    %s19 = ssub.s32 %s13, 2
    %s26 = sadd.s32 1, %s21
    %p27 = scmp.ge.s32.totalorder %s26, 1
    %s28 = scalar_select %p27, 0, %s26
    %s29 = sadd.s32 1, %s20
    %s30 = scalar_select %p27, %s29, %s20
    %p31 = scmp.ge.s32.totalorder %s30, 2
    %s32 = scalar_select %p31, 0, %s30
    %s33 = ssub.s32 %s20, %s32
    %s34 = ssub.s32 %s21, %s28
    %s35 = sor.u32 %s33, %s34
    %p36 = scmp.eq.s32.totalorder %s35, 0
    %s38 = sadd.s32 %s37, 1
    %s39 = scalar_select %p36, %s37, %s38
    %p42 = pneg %p36
    %p43 = scmp.eq.s32.totalorder %s13, 1
    %p44 = por %p42, %p43
    %p45 = scmp.ne.s32.totalorder %s37, %s40
    %p46 = scmp.eq.s32.totalorder %s13, 0
    %p47 = por %p45, %p46
    %p48 = scmp.ne.s32.totalorder %s37, %s40
    %p49 = scmp.eq.s32.totalorder %s18, 1
    %p50 = por %p48, %p49
    %p51 = scmp.ne.s32.totalorder %s40, %s41
    %p52 = scmp.eq.s32.totalorder %s18, 0
    %p53 = por %p51, %p52
    %p54 = scmp.ne.s32.totalorder %s40, %s41
    %p55 = scmp.eq.s32.totalorder %s19, 1
    %p56 = por %p54, %p55
    %p58 = scmp.ne.s32.totalorder %s41, %s57
    %p59 = scmp.eq.s32.totalorder %s19, 0
    %p60 = por %p58, %p59
    %s62 = sadd.s32 %s61, 1
    %p65 = scmp.eq.s32.totalorder %s13, 1
    %p66 = scmp.ne.s32.totalorder %s61, %s63
    %p67 = scmp.eq.s32.totalorder %s13, 0
    %p68 = por %p66, %p67
    %p69 = scmp.ne.s32.totalorder %s61, %s63
    %p70 = scmp.eq.s32.totalorder %s18, 1
    %p71 = por %p69, %p70
    %p72 = scmp.ne.s32.totalorder %s63, %s64
    %p73 = scmp.eq.s32.totalorder %s18, 0
    %p74 = por %p72, %p73
    %p75 = scmp.ne.s32.totalorder %s63, %s64
    %p76 = scmp.eq.s32.totalorder %s19, 1
    %p77 = por %p75, %p76
    %p79 = scmp.ne.s32.totalorder %s64, %s78
    %p80 = scmp.eq.s32.totalorder %s19, 0
    %p81 = por %p79, %p80
    %s83 = sadd.s32 %s82, 1
    %p86 = scmp.eq.s32.totalorder %s13, 1
    %p87 = scmp.ne.s32.totalorder %s82, %s84
    %p88 = scmp.eq.s32.totalorder %s13, 0
    %p89 = por %p87, %p88
    %p90 = scmp.ne.s32.totalorder %s82, %s84
    %p91 = scmp.eq.s32.totalorder %s18, 1
    %p92 = por %p90, %p91
    %p93 = scmp.ne.s32.totalorder %s84, %s85
    %p94 = scmp.eq.s32.totalorder %s18, 0
    %p95 = por %p93, %p94
    %p96 = scmp.ne.s32.totalorder %s84, %s85
    %p97 = scmp.eq.s32.totalorder %s19, 1
    %p98 = por %p96, %p97
    %p100 = scmp.ne.s32.totalorder %s85, %s99
    %p101 = scmp.eq.s32.totalorder %s19, 0
    %p102 = por %p100, %p101
    %s104 = sadd.s32 %s103, 1
    %p107 = scmp.eq.s32.totalorder %s13, 1
    %p108 = scmp.ne.s32.totalorder %s103, %s105
    %p109 = scmp.eq.s32.totalorder %s13, 0
    %p110 = por %p108, %p109
    %p111 = scmp.ne.s32.totalorder %s103, %s105
    %p112 = scmp.eq.s32.totalorder %s18, 1
    %p113 = por %p111, %p112
    %p114 = scmp.ne.s32.totalorder %s105, %s106
    %p115 = scmp.eq.s32.totalorder %s18, 0
    %p116 = por %p114, %p115
    %p117 = scmp.ne.s32.totalorder %s105, %s106
    %p118 = scmp.eq.s32.totalorder %s19, 1
    %p119 = por %p117, %p118
    %p121 = scmp.ne.s32.totalorder %s106, %s120
    %p122 = scmp.eq.s32.totalorder %s19, 0
    %p123 = por %p121, %p122
    %s125 = sadd.s32 %s124, 1
    %p128 = scmp.eq.s32.totalorder %s13, 1
    %p129 = scmp.ne.s32.totalorder %s124, %s126
    %p130 = scmp.eq.s32.totalorder %s13, 0
    %p131 = por %p129, %p130
    %p132 = scmp.ne.s32.totalorder %s124, %s126
    %p133 = scmp.eq.s32.totalorder %s18, 1
    %p134 = por %p132, %p133
    %p135 = scmp.ne.s32.totalorder %s126, %s127
    %p136 = scmp.eq.s32.totalorder %s18, 0
    %p137 = por %p135, %p136
    %p138 = scmp.ne.s32.totalorder %s126, %s127
    %p139 = scmp.eq.s32.totalorder %s19, 1
    %p140 = por %p138, %p139
    %p142 = scmp.ne.s32.totalorder %s127, %s141
    %p143 = scmp.eq.s32.totalorder %s19, 0
    %p144 = por %p142, %p143
    %s145 = ssub.s32 %s20, %s32
    %p146 = scmp.eq.s32.totalorder %s145, 0
    %s148 = sadd.s32 %s147, 1
    %s149 = scalar_select %p146, %s147, %s148
    %p152 = pneg %p146
    %p153 = scmp.eq.s32.totalorder %s13, 1
    %p154 = por %p152, %p153
    %p155 = scmp.ne.s32.totalorder %s147, %s150
    %p156 = scmp.eq.s32.totalorder %s13, 0
    %p157 = por %p155, %p156
    %p158 = scmp.ne.s32.totalorder %s147, %s150
    %p159 = scmp.eq.s32.totalorder %s18, 1
    %p160 = por %p158, %p159
    %p161 = scmp.ne.s32.totalorder %s150, %s151
    %p162 = scmp.eq.s32.totalorder %s18, 0
    %p163 = por %p161, %p162
    %p164 = scmp.ne.s32.totalorder %s150, %s151
    %p165 = scmp.eq.s32.totalorder %s19, 1
    %p166 = por %p164, %p165
    %p168 = scmp.ne.s32.totalorder %s151, %s167
    %p169 = scmp.eq.s32.totalorder %s19, 0
    %p170 = por %p168, %p169
    %p171 = scmp.le.s32.totalorder 1, %s13
    %p172 = scmp.lt.s32.totalorder %s13, 3
    %p173 = pnand %p171, %p172
    %p174 = pneg %p173
    // Predicated region
    $region9: #{discriminator_forward.3} parent=5 // pred_check
      _
    $region10: #{discriminator_forward.3} parent=5 // pred_check_branch
      %176 = sbr.rel (%p173) target = $region12
    $region11: #{discriminator_forward.3} parent=5 // pred_region
      %s177 = ssub.s32 %s13, 1
      // Predicated region
      $region13: #{discriminator_forward.3} parent=11 // pred_check
        %p178 = pneg %p74
      $region14: #{discriminator_forward.3} parent=11 // pred_check_branch
        %180 = sbr.rel (%p178) target = $region16
      $region15: #{discriminator_forward.3} parent=11 // pred_region
        _
      $region16: #{discriminator_forward.3} parent=11 // pred_fallthru
        _
      // Predicated region
      $region17: #{discriminator_forward.3} parent=11 // pred_check
        %p181 = pneg %p95
      $region18: #{discriminator_forward.3} parent=11 // pred_check_branch
        %183 = sbr.rel (%p181) target = $region20
      $region19: #{discriminator_forward.3} parent=11 // pred_region
        _
      $region20: #{discriminator_forward.3} parent=11 // pred_fallthru
        _
      // Predicated region
      $region21: #{discriminator_forward.3} parent=11 // pred_check
        %p184 = pneg %p116
      $region22: #{discriminator_forward.3} parent=11 // pred_check_branch
        %186 = sbr.rel (%p184) target = $region24
      $region23: #{discriminator_forward.3} parent=11 // pred_region
        _
      $region24: #{discriminator_forward.3} parent=11 // pred_fallthru
        _
      // Predicated region
      $region25: #{discriminator_forward.3} parent=11 // pred_check
        %p187 = pneg %p137
      $region26: #{discriminator_forward.3} parent=11 // pred_check_branch
        %189 = sbr.rel (%p187) target = $region28
      $region27: #{discriminator_forward.3} parent=11 // pred_region
        _
      $region28: #{discriminator_forward.3} parent=11 // pred_fallthru
        _
    $region12: #{discriminator_forward.3} parent=5 // pred_fallthru
      _
    %p190 = scmp.lt.s32.totalorder %s13, 2
    // Predicated region
    $region29: #{discriminator_forward.3} parent=5 // pred_check
      %p191 = pneg %p190
    $region30: #{discriminator_forward.3} parent=5 // pred_check_branch
      %193 = sbr.rel (%p191) target = $region32
    $region31: #{discriminator_forward.3} parent=5 // pred_region
      // Predicated region
      $region33: #{discriminator_forward.3} parent=31 // pred_check
        %p194 = pneg %p47
      $region34: #{discriminator_forward.3} parent=31 // pred_check_branch
        %196 = sbr.rel (%p194) target = $region36
      $region35: #{discriminator_forward.3} parent=31 // pred_region
        %s197 = smul.u32 2, %s21
        %p198 = scmp.lt.s32.totalorder %s20, 1
        %s199 = scalar_select %p198, %s20, 1
        %p200 = scmp.lt.s32.totalorder %s197, 1
        %s201 = scalar_select %p200, %s197, 1
        %s202 = smul.addr %s201, 8
        %s203 = smul.addr %s199, 16
        %s204 = sadd.s32 %s202, %s203
        %s205 = smul.addr %s204, 4
        %s206 = scalar_lea.vmem %s0, %s205
        %s207 = smul.u32 2, %s21
      $region36: #{discriminator_forward.3} parent=31 // pred_fallthru
        _
    $region32: #{discriminator_forward.3} parent=5 // pred_fallthru
      _
    %p208 = scmp.le.s32.totalorder 1, %s13
    %p209 = scmp.lt.s32.totalorder %s13, 3
    %p210 = pnand %p208, %p209
    %p211 = pneg %p210
    // Predicated region
    $region37: #{discriminator_forward.3} parent=5 // pred_check
      _
    $region38: #{discriminator_forward.3} parent=5 // pred_check_branch
      %213 = sbr.rel (%p210) target = $region40
    $region39: #{discriminator_forward.3} parent=5 // pred_region
      %s214 = ssub.s32 %s13, 1
      %s215 = smul.u32 2, %s23
      %p216 = scmp.lt.s32.totalorder %s22, 1
      %s217 = scalar_select %p216, %s22, 1
      %p218 = scmp.lt.s32.totalorder %s215, 1
      %s219 = scalar_select %p218, %s215, 1
      %s220 = smul.addr %s219, 8
      %s221 = smul.addr %s217, 16
      %s222 = sadd.s32 %s220, %s221
      %s223 = smul.addr %s222, 4
      %s224 = scalar_lea.vmem %s0, %s223
      %p225 = pneg %p53
      %p226 = pneg %p50
      %p227 = pneg %p74
      %p228 = pneg %p71
      %p229 = pneg %p95
      %p230 = pneg %p92
      %p231 = pneg %p116
      %p232 = pneg %p113
      %p233 = pneg %p137
      %p234 = pneg %p134
      %p235 = pneg %p163
      %p236 = pneg %p160
      %p237 = scmp.lt.s32.totalorder %s22, 1
      %s238 = scalar_select %p237, %s22, 1
      %s239 = smul.addr %s238, 8
      %s240 = scalar_lea.vmem %s5, %s239
      %s241 = smul.u32 2, %s23
      %p242 = scmp.lt.s32.totalorder %s22, 1
      %s243 = scalar_select %p242, %s22, 1
      %p244 = scmp.lt.s32.totalorder %s241, 1
      %s245 = scalar_select %p244, %s241, 1
      %s246 = smul.addr %s245, 8
      %s247 = smul.addr %s243, 16
      %s248 = sadd.s32 %s246, %s247
      %s249 = smul.addr %s248, 4
      %s250 = scalar_lea.vmem %s0, %s249
      %s251 = smul.u32 2, %s23
      %p252 = scmp.lt.s32.totalorder %s22, 1
      %s253 = scalar_select %p252, %s22, 1
      %s254 = smul.addr %s253, 8
      %s255 = scalar_lea.vmem %s5, %s254
      %p257 = scmp.eq.s32.totalorder %s23, 0
      // Predicated region
      $region41: #{discriminator_forward.3} parent=39 // pred_check
        %p258 = pneg %p257
      $region42: #{discriminator_forward.3} parent=39 // pred_check_branch
        %260 = sbr.rel (%p258) target = $region44
      $region43: #{discriminator_forward.3} parent=39 // pred_region
        %261 = vst [vmem:[#allocation2] sm:$0x1] 0.0
      $region44: #{discriminator_forward.3} parent=39 // pred_fallthru
        _
      %v262 = vld [vmem:[%s250] sm:$0xff]
      %v263 = vld [vmem:[%s250 + $0x8] sm:$0xff]
      %v264 = vld [vmem:[%s250 + $0x10] sm:$0xff]
      %v265 = vld [vmem:[%s250 + $0x18] sm:$0xff]
      %v266 = vld [vmem:[%s250 + $0x20] sm:$0xff]
      %v267 = vld [vmem:[%s250 + $0x28] sm:$0xff]
      %v268 = vld [vmem:[%s250 + $0x30] sm:$0xff]
      %v269 = vld [vmem:[%s250 + $0x38] sm:$0xff]
      %v270 = vld [vmem:[%s1] sm:$0xf]
      %v271 = vld [vmem:[%s1 + $0x4] sm:$0xf]
      %v272 = vld [vmem:[%s1 + $0x8] sm:$0xf]
      %v273 = vld [vmem:[%s1 + $0xc] sm:$0xf]
      %v274 = vld [vmem:[%s1 + $0x10] sm:$0xf]
      %v275 = vld [vmem:[%s1 + $0x14] sm:$0xf]
      %v276 = vld [vmem:[%s1 + $0x18] sm:$0xf]
      %v277 = vld [vmem:[%s1 + $0x1c] sm:$0xf]
      %v278 = vld [vmem:[%s1 + $0x20] sm:$0xf]
      %v279 = vld [vmem:[%s1 + $0x24] sm:$0xf]
      %v280 = vld [vmem:[%s1 + $0x28] sm:$0xf]
      %v281 = vld [vmem:[%s1 + $0x2c] sm:$0xf]
      %v282 = vld [vmem:[%s1 + $0x30] sm:$0xf]
      %v283 = vld [vmem:[%s1 + $0x34] sm:$0xf]
      %v284 = vld [vmem:[%s1 + $0x38] sm:$0xf]
      %v285 = vld [vmem:[%s1 + $0x3c] sm:$0xf]
      %v286 = vld [vmem:[%s1 + $0x40] sm:$0xf]
      %v287 = vld [vmem:[%s1 + $0x44] sm:$0xf]
      %v288 = vld [vmem:[%s1 + $0x48] sm:$0xf]
      %v289 = vld [vmem:[%s1 + $0x4c] sm:$0xf]
      %v290 = vld [vmem:[%s1 + $0x50] sm:$0xf]
      %v291 = vld [vmem:[%s1 + $0x54] sm:$0xf]
      %v292 = vld [vmem:[%s1 + $0x58] sm:$0xf]
      %v293 = vld [vmem:[%s1 + $0x5c] sm:$0xf]
      %v294 = vld [vmem:[%s1 + $0x60] sm:$0xf]
      %v295 = vld [vmem:[%s1 + $0x64] sm:$0xf]
      %v296 = vld [vmem:[%s1 + $0x68] sm:$0xf]
      %v297 = vld [vmem:[%s1 + $0x6c] sm:$0xf]
      %v298 = vld [vmem:[%s1 + $0x70] sm:$0xf]
      %v299 = vld [vmem:[%s1 + $0x74] sm:$0xf]
      %v300 = vld [vmem:[%s1 + $0x78] sm:$0xf]
      %v301 = vld [vmem:[%s1 + $0x7c] sm:$0xf]
      %v302 = vld [vmem:[%s1 + $0x80] sm:$0xf]
      %v303 = vld [vmem:[%s1 + $0x84] sm:$0xf]
      %v304 = vld [vmem:[%s1 + $0x88] sm:$0xf]
      %v305 = vld [vmem:[%s1 + $0x8c] sm:$0xf]
      %v306 = vld [vmem:[%s1 + $0x90] sm:$0xf]
      %v307 = vld [vmem:[%s1 + $0x94] sm:$0xf]
      %v308 = vld [vmem:[%s1 + $0x98] sm:$0xf]
      %v309 = vld [vmem:[%s1 + $0x9c] sm:$0xf]
      %v310 = vld [vmem:[%s1 + $0xa0] sm:$0xf]
      %v311 = vld [vmem:[%s1 + $0xa4] sm:$0xf]
      %v312 = vld [vmem:[%s1 + $0xa8] sm:$0xf]
      %v313 = vld [vmem:[%s1 + $0xac] sm:$0xf]
      %v314 = vld [vmem:[%s1 + $0xb0] sm:$0xf]
      %v315 = vld [vmem:[%s1 + $0xb4] sm:$0xf]
      %v316 = vld [vmem:[%s1 + $0xb8] sm:$0xf]
      %v317 = vld [vmem:[%s1 + $0xbc] sm:$0xf]
      %v318 = vld [vmem:[%s1 + $0xc0] sm:$0xf]
      %v319 = vld [vmem:[%s1 + $0xc4] sm:$0xf]
      %v320 = vld [vmem:[%s1 + $0xc8] sm:$0xf]
      %v321 = vld [vmem:[%s1 + $0xcc] sm:$0xf]
      %v322 = vld [vmem:[%s1 + $0xd0] sm:$0xf]
      %v323 = vld [vmem:[%s1 + $0xd4] sm:$0xf]
      %v324 = vld [vmem:[%s1 + $0xd8] sm:$0xf]
      %v325 = vld [vmem:[%s1 + $0xdc] sm:$0xf]
      %v326 = vld [vmem:[%s1 + $0xe0] sm:$0xf]
      %v327 = vld [vmem:[%s1 + $0xe4] sm:$0xf]
      %v328 = vld [vmem:[%s1 + $0xe8] sm:$0xf]
      %v329 = vld [vmem:[%s1 + $0xec] sm:$0xf]
      %v330 = vld [vmem:[%s1 + $0xf0] sm:$0xf]
      %v331 = vld [vmem:[%s1 + $0xf4] sm:$0xf]
      %v332 = vld [vmem:[%s1 + $0xf8] sm:$0xf]
      %v333 = vld [vmem:[%s1 + $0xfc] sm:$0xf]
      %v334 = vld [vmem:[%s1 + $0x100] sm:$0xf]
      %v335 = vld [vmem:[%s1 + $0x104] sm:$0xf]
      %v336 = vld [vmem:[%s1 + $0x108] sm:$0xf]
      %v337 = vld [vmem:[%s1 + $0x10c] sm:$0xf]
      %v338 = vld [vmem:[%s1 + $0x110] sm:$0xf]
      %v339 = vld [vmem:[%s1 + $0x114] sm:$0xf]
      %v340 = vld [vmem:[%s1 + $0x118] sm:$0xf]
      %v341 = vld [vmem:[%s1 + $0x11c] sm:$0xf]
      %v342 = vld [vmem:[%s1 + $0x120] sm:$0xf]
      %v343 = vld [vmem:[%s1 + $0x124] sm:$0xf]
      %v344 = vld [vmem:[%s1 + $0x128] sm:$0xf]
      %v345 = vld [vmem:[%s1 + $0x12c] sm:$0xf]
      %v346 = vld [vmem:[%s1 + $0x130] sm:$0xf]
      %v347 = vld [vmem:[%s1 + $0x134] sm:$0xf]
      %v348 = vld [vmem:[%s1 + $0x138] sm:$0xf]
      %v349 = vld [vmem:[%s1 + $0x13c] sm:$0xf]
      %v350 = vld [vmem:[%s1 + $0x140] sm:$0xf]
      %v351 = vld [vmem:[%s1 + $0x144] sm:$0xf]
      %v352 = vld [vmem:[%s1 + $0x148] sm:$0xf]
      %v353 = vld [vmem:[%s1 + $0x14c] sm:$0xf]
      %v354 = vld [vmem:[%s1 + $0x150] sm:$0xf]
      %v355 = vld [vmem:[%s1 + $0x154] sm:$0xf]
      %v356 = vld [vmem:[%s1 + $0x158] sm:$0xf]
      %v357 = vld [vmem:[%s1 + $0x15c] sm:$0xf]
      %v358 = vld [vmem:[%s1 + $0x160] sm:$0xf]
      %v359 = vld [vmem:[%s1 + $0x164] sm:$0xf]
      %v360 = vld [vmem:[%s1 + $0x168] sm:$0xf]
      %v361 = vld [vmem:[%s1 + $0x16c] sm:$0xf]
      %v362 = vld [vmem:[%s1 + $0x170] sm:$0xf]
      %v363 = vld [vmem:[%s1 + $0x174] sm:$0xf]
      %v364 = vld [vmem:[%s1 + $0x178] sm:$0xf]
      %v365 = vld [vmem:[%s1 + $0x17c] sm:$0xf]
      %v366 = vld [vmem:[%s1 + $0x180] sm:$0xf]
      %v367 = vld [vmem:[%s1 + $0x184] sm:$0xf]
      %v368 = vld [vmem:[%s1 + $0x188] sm:$0xf]
      %v369 = vld [vmem:[%s1 + $0x18c] sm:$0xf]
      %v370 = vld [vmem:[%s1 + $0x190] sm:$0xf]
      %v371 = vld [vmem:[%s1 + $0x194] sm:$0xf]
      %v372 = vld [vmem:[%s1 + $0x198] sm:$0xf]
      %v373 = vld [vmem:[%s1 + $0x19c] sm:$0xf]
      %v374 = vld [vmem:[%s1 + $0x1a0] sm:$0xf]
      %v375 = vld [vmem:[%s1 + $0x1a4] sm:$0xf]
      %v376 = vld [vmem:[%s1 + $0x1a8] sm:$0xf]
      %v377 = vld [vmem:[%s1 + $0x1ac] sm:$0xf]
      %v378 = vld [vmem:[%s1 + $0x1b0] sm:$0xf]
      %v379 = vld [vmem:[%s1 + $0x1b4] sm:$0xf]
      %v380 = vld [vmem:[%s1 + $0x1b8] sm:$0xf]
      %v381 = vld [vmem:[%s1 + $0x1bc] sm:$0xf]
      %v382 = vld [vmem:[%s1 + $0x1c0] sm:$0xf]
      %v383 = vld [vmem:[%s1 + $0x1c4] sm:$0xf]
      %v384 = vld [vmem:[%s1 + $0x1c8] sm:$0xf]
      %v385 = vld [vmem:[%s1 + $0x1cc] sm:$0xf]
      %v386 = vld [vmem:[%s1 + $0x1d0] sm:$0xf]
      %v387 = vld [vmem:[%s1 + $0x1d4] sm:$0xf]
      %v388 = vld [vmem:[%s1 + $0x1d8] sm:$0xf]
      %v389 = vld [vmem:[%s1 + $0x1dc] sm:$0xf]
      %v390 = vld [vmem:[%s1 + $0x1e0] sm:$0xf]
      %v391 = vld [vmem:[%s1 + $0x1e4] sm:$0xf]
      %v392 = vld [vmem:[%s1 + $0x1e8] sm:$0xf]
      %v393 = vld [vmem:[%s1 + $0x1ec] sm:$0xf]
      %v394 = vld [vmem:[%s1 + $0x1f0] sm:$0xf]
      %v395 = vld [vmem:[%s1 + $0x1f4] sm:$0xf]
      %v396 = vld [vmem:[%s1 + $0x1f8] sm:$0xf]
      %v397 = vld [vmem:[%s1 + $0x1fc] sm:$0xf]
      %v398 = vld [vmem:[%s2] sm:$0x1]
      %v400 = vlaneseq
      %v401 = vshrl.u32 %v400, 7
      %v402 = vsub.s32 0, %v401
      %v403 = vrot.slane %v398, %v402
      %v413 = vunpack.c.l.b16 %v262
      %v414 = vunpack.c.h.b16 %v262
      %v415 = vunpack.c.l.b16 %v263
      %v416 = vunpack.c.h.b16 %v263
      %v417 = vunpack.c.l.b16 %v264
      %v418 = vunpack.c.h.b16 %v264
      %v419 = vunpack.c.l.b16 %v265
      %v420 = vunpack.c.h.b16 %v265
      %v421 = vunpack.c.l.b16 %v266
      %v422 = vunpack.c.h.b16 %v266
      %v423 = vunpack.c.l.b16 %v267
      %v424 = vunpack.c.h.b16 %v267
      %v425 = vunpack.c.l.b16 %v268
      %v426 = vunpack.c.h.b16 %v268
      %v427 = vunpack.c.l.b16 %v269
      %v428 = vunpack.c.h.b16 %v269
      %v429 = vpack.c.b16 %v421, %v413
      %v430 = vpack.c.b16 %v422, %v414
      %v431 = vpack.c.b16 %v423, %v415
      %v432 = vpack.c.b16 %v424, %v416
      %v433 = vpack.c.b16 %v425, %v417
      %v434 = vpack.c.b16 %v426, %v418
      %v435 = vpack.c.b16 %v427, %v419
      %v436 = vpack.c.b16 %v428, %v420
      %v573 = vunpack.c.l.b16 %v270
      %v574 = vunpack.c.l.b16 %v271
      %v575 = vunpack.c.l.b16 %v272
      %v576 = vunpack.c.l.b16 %v273
      %v577 = vunpack.c.l.b16 %v274
      %v578 = vunpack.c.l.b16 %v275
      %v579 = vunpack.c.l.b16 %v276
      %v580 = vunpack.c.l.b16 %v277
      %v581 = vunpack.c.l.b16 %v278
      %v582 = vunpack.c.l.b16 %v279
      %v583 = vunpack.c.l.b16 %v280
      %v584 = vunpack.c.l.b16 %v281
      %v585 = vunpack.c.l.b16 %v282
      %v586 = vunpack.c.l.b16 %v283
      %v587 = vunpack.c.l.b16 %v284
      %v588 = vunpack.c.l.b16 %v285
      %v589 = vunpack.c.l.b16 %v286
      %v590 = vunpack.c.l.b16 %v287
      %v591 = vunpack.c.l.b16 %v288
      %v592 = vunpack.c.l.b16 %v289
      %v593 = vunpack.c.l.b16 %v290
      %v594 = vunpack.c.l.b16 %v291
      %v595 = vunpack.c.l.b16 %v292
      %v596 = vunpack.c.l.b16 %v293
      %v597 = vunpack.c.l.b16 %v294
      %v598 = vunpack.c.l.b16 %v295
      %v599 = vunpack.c.l.b16 %v296
      %v600 = vunpack.c.l.b16 %v297
      %v601 = vunpack.c.l.b16 %v298
      %v602 = vunpack.c.l.b16 %v299
      %v603 = vunpack.c.l.b16 %v300
      %v604 = vunpack.c.l.b16 %v301
      %v605 = vunpack.c.l.b16 %v302
      %v606 = vunpack.c.l.b16 %v303
      %v607 = vunpack.c.l.b16 %v304
      %v608 = vunpack.c.l.b16 %v305
      %v609 = vunpack.c.l.b16 %v306
      %v610 = vunpack.c.l.b16 %v307
      %v611 = vunpack.c.l.b16 %v308
      %v612 = vunpack.c.l.b16 %v309
      %v613 = vunpack.c.l.b16 %v310
      %v614 = vunpack.c.l.b16 %v311
      %v615 = vunpack.c.l.b16 %v312
      %v616 = vunpack.c.l.b16 %v313
      %v617 = vunpack.c.l.b16 %v314
      %v618 = vunpack.c.l.b16 %v315
      %v619 = vunpack.c.l.b16 %v316
      %v620 = vunpack.c.l.b16 %v317
      %v621 = vunpack.c.l.b16 %v318
      %v622 = vunpack.c.l.b16 %v319
      %v623 = vunpack.c.l.b16 %v320
      %v624 = vunpack.c.l.b16 %v321
      %v625 = vunpack.c.l.b16 %v322
      %v626 = vunpack.c.l.b16 %v323
      %v627 = vunpack.c.l.b16 %v324
      %v628 = vunpack.c.l.b16 %v325
      %v629 = vunpack.c.l.b16 %v326
      %v630 = vunpack.c.l.b16 %v327
      %v631 = vunpack.c.l.b16 %v328
      %v632 = vunpack.c.l.b16 %v329
      %v633 = vunpack.c.l.b16 %v330
      %v634 = vunpack.c.l.b16 %v331
      %v635 = vunpack.c.l.b16 %v332
      %v636 = vunpack.c.l.b16 %v333
      %v637 = vunpack.c.l.b16 %v334
      %v638 = vunpack.c.l.b16 %v335
      %v639 = vunpack.c.l.b16 %v336
      %v640 = vunpack.c.l.b16 %v337
      %v641 = vunpack.c.l.b16 %v338
      %v642 = vunpack.c.l.b16 %v339
      %v643 = vunpack.c.l.b16 %v340
      %v644 = vunpack.c.l.b16 %v341
      %v645 = vunpack.c.l.b16 %v342
      %v646 = vunpack.c.l.b16 %v343
      %v647 = vunpack.c.l.b16 %v344
      %v648 = vunpack.c.l.b16 %v345
      %v649 = vunpack.c.l.b16 %v346
      %v650 = vunpack.c.l.b16 %v347
      %v651 = vunpack.c.l.b16 %v348
      %v652 = vunpack.c.l.b16 %v349
      %v653 = vunpack.c.l.b16 %v350
      %v654 = vunpack.c.l.b16 %v351
      %v655 = vunpack.c.l.b16 %v352
      %v656 = vunpack.c.l.b16 %v353
      %v657 = vunpack.c.l.b16 %v354
      %v658 = vunpack.c.l.b16 %v355
      %v659 = vunpack.c.l.b16 %v356
      %v660 = vunpack.c.l.b16 %v357
      %v661 = vunpack.c.l.b16 %v358
      %v662 = vunpack.c.l.b16 %v359
      %v663 = vunpack.c.l.b16 %v360
      %v664 = vunpack.c.l.b16 %v361
      %v665 = vunpack.c.l.b16 %v362
      %v666 = vunpack.c.l.b16 %v363
      %v667 = vunpack.c.l.b16 %v364
      %v668 = vunpack.c.l.b16 %v365
      %v669 = vunpack.c.l.b16 %v366
      %v670 = vunpack.c.l.b16 %v367
      %v671 = vunpack.c.l.b16 %v368
      %v672 = vunpack.c.l.b16 %v369
      %v673 = vunpack.c.l.b16 %v370
      %v674 = vunpack.c.l.b16 %v371
      %v675 = vunpack.c.l.b16 %v372
      %v676 = vunpack.c.l.b16 %v373
      %v677 = vunpack.c.l.b16 %v374
      %v678 = vunpack.c.l.b16 %v375
      %v679 = vunpack.c.l.b16 %v376
      %v680 = vunpack.c.l.b16 %v377
      %v681 = vunpack.c.l.b16 %v378
      %v682 = vunpack.c.l.b16 %v379
      %v683 = vunpack.c.l.b16 %v380
      %v684 = vunpack.c.l.b16 %v381
      %v685 = vunpack.c.l.b16 %v382
      %v686 = vunpack.c.l.b16 %v383
      %v687 = vunpack.c.l.b16 %v384
      %v688 = vunpack.c.l.b16 %v385
      %v689 = vunpack.c.l.b16 %v386
      %v690 = vunpack.c.l.b16 %v387
      %v691 = vunpack.c.l.b16 %v388
      %v692 = vunpack.c.l.b16 %v389
      %v693 = vunpack.c.l.b16 %v390
      %v694 = vunpack.c.l.b16 %v391
      %v695 = vunpack.c.l.b16 %v392
      %v696 = vunpack.c.l.b16 %v393
      %v697 = vunpack.c.l.b16 %v394
      %v698 = vunpack.c.l.b16 %v395
      %v699 = vunpack.c.l.b16 %v396
      %v700 = vunpack.c.l.b16 %v397
      %v701 = vpack.c.b16 %v574, %v573
      %v702 = vpack.c.b16 %v576, %v575
      %v703 = vpack.c.b16 %v578, %v577
      %v704 = vpack.c.b16 %v580, %v579
      %v705 = vpack.c.b16 %v582, %v581
      %v706 = vpack.c.b16 %v584, %v583
      %v707 = vpack.c.b16 %v586, %v585
      %v708 = vpack.c.b16 %v588, %v587
      %v709 = vpack.c.b16 %v590, %v589
      %v710 = vpack.c.b16 %v592, %v591
      %v711 = vpack.c.b16 %v594, %v593
      %v712 = vpack.c.b16 %v596, %v595
      %v713 = vpack.c.b16 %v598, %v597
      %v714 = vpack.c.b16 %v600, %v599
      %v715 = vpack.c.b16 %v602, %v601
      %v716 = vpack.c.b16 %v604, %v603
      %v717 = vpack.c.b16 %v606, %v605
      %v718 = vpack.c.b16 %v608, %v607
      %v719 = vpack.c.b16 %v610, %v609
      %v720 = vpack.c.b16 %v612, %v611
      %v721 = vpack.c.b16 %v614, %v613
      %v722 = vpack.c.b16 %v616, %v615
      %v723 = vpack.c.b16 %v618, %v617
      %v724 = vpack.c.b16 %v620, %v619
      %v725 = vpack.c.b16 %v622, %v621
      %v726 = vpack.c.b16 %v624, %v623
      %v727 = vpack.c.b16 %v626, %v625
      %v728 = vpack.c.b16 %v628, %v627
      %v729 = vpack.c.b16 %v630, %v629
      %v730 = vpack.c.b16 %v632, %v631
      %v731 = vpack.c.b16 %v634, %v633
      %v732 = vpack.c.b16 %v636, %v635
      %v733 = vpack.c.b16 %v638, %v637
      %v734 = vpack.c.b16 %v640, %v639
      %v735 = vpack.c.b16 %v642, %v641
      %v736 = vpack.c.b16 %v644, %v643
      %v737 = vpack.c.b16 %v646, %v645
      %v738 = vpack.c.b16 %v648, %v647
      %v739 = vpack.c.b16 %v650, %v649
      %v740 = vpack.c.b16 %v652, %v651
      %v741 = vpack.c.b16 %v654, %v653
      %v742 = vpack.c.b16 %v656, %v655
      %v743 = vpack.c.b16 %v658, %v657
      %v744 = vpack.c.b16 %v660, %v659
      %v745 = vpack.c.b16 %v662, %v661
      %v746 = vpack.c.b16 %v664, %v663
      %v747 = vpack.c.b16 %v666, %v665
      %v748 = vpack.c.b16 %v668, %v667
      %v749 = vpack.c.b16 %v670, %v669
      %v750 = vpack.c.b16 %v672, %v671
      %v751 = vpack.c.b16 %v674, %v673
      %v752 = vpack.c.b16 %v676, %v675
      %v753 = vpack.c.b16 %v678, %v677
      %v754 = vpack.c.b16 %v680, %v679
      %v755 = vpack.c.b16 %v682, %v681
      %v756 = vpack.c.b16 %v684, %v683
      %v757 = vpack.c.b16 %v686, %v685
      %v758 = vpack.c.b16 %v688, %v687
      %v759 = vpack.c.b16 %v690, %v689
      %v760 = vpack.c.b16 %v692, %v691
      %v761 = vpack.c.b16 %v694, %v693
      %v762 = vpack.c.b16 %v696, %v695
      %v763 = vpack.c.b16 %v698, %v697
      %v764 = vpack.c.b16 %v700, %v699
      %829 = vmatprep.subr.bf16.mxu0 0
      %830 = vmatpush1.bf16.msra.mxu0 %v701
      %831 = vmatprep.subr.bf16.mxu0 0
      %832 = vmatpush1.bf16.msra.mxu0 %v702
      %833 = vmatprep.subr.bf16.mxu0 0
      %834 = vmatpush1.bf16.msra.mxu0 %v703
      %835 = vmatprep.subr.bf16.mxu0 0
      %836 = vmatpush1.bf16.msra.mxu0 %v704
      %837 = vmatprep.subr.bf16.mxu0 0
      %838 = vmatpush1.bf16.msra.mxu0 %v705
      %839 = vmatprep.subr.bf16.mxu0 0
      %840 = vmatpush1.bf16.msra.mxu0 %v706
      %841 = vmatprep.subr.bf16.mxu0 0
      %842 = vmatpush1.bf16.msra.mxu0 %v707
      %843 = vmatprep.subr.bf16.mxu0 0
      %844 = vmatpush1.bf16.msra.mxu0 %v708
      %845 = vmatprep.subr.bf16.mxu0 0
      %846 = vmatpush1.bf16.msra.mxu0 %v709
      %847 = vmatprep.subr.bf16.mxu0 0
      %848 = vmatpush1.bf16.msra.mxu0 %v710
      %849 = vmatprep.subr.bf16.mxu0 0
      %850 = vmatpush1.bf16.msra.mxu0 %v711
      %851 = vmatprep.subr.bf16.mxu0 0
      %852 = vmatpush1.bf16.msra.mxu0 %v712
      %853 = vmatprep.subr.bf16.mxu0 0
      %854 = vmatpush1.bf16.msra.mxu0 %v713
      %855 = vmatprep.subr.bf16.mxu0 0
      %856 = vmatpush1.bf16.msra.mxu0 %v714
      %857 = vmatprep.subr.bf16.mxu0 0
      %858 = vmatpush1.bf16.msra.mxu0 %v715
      %859 = vmatprep.subr.bf16.mxu0 0
      %860 = vmatpush1.bf16.msra.mxu0 %v716
      %861 = vmatprep.mubr.bf16.mxu0 %v430
      %862 = vmatmul.mubr.bf16.gmra.mrb[0].mxu0 %v429
      %v863 = vpop.f32.mrb[0].mxu0
      %v864 = vadd.f32 %v403, %v863
      %v865 = vpop.f32.mrb[0].mxu0
      %v866 = vpop.f32.mrb[0].mxu0
      %v867 = vadd.f32 %v403, %v866
      %v868 = vpop.f32.mrb[0].mxu0
      %869 = vdwg.mxu0
      %870 = vmatprep.subr.bf16.mxu0 0
      %871 = vmatpush1.bf16.msra.mxu0 %v717
      %872 = vmatprep.subr.bf16.mxu0 0
      %873 = vmatpush1.bf16.msra.mxu0 %v718
      %874 = vmatprep.subr.bf16.mxu0 0
      %875 = vmatpush1.bf16.msra.mxu0 %v719
      %876 = vmatprep.subr.bf16.mxu0 0
      %877 = vmatpush1.bf16.msra.mxu0 %v720
      %878 = vmatprep.subr.bf16.mxu0 0
      %879 = vmatpush1.bf16.msra.mxu0 %v721
      %880 = vmatprep.subr.bf16.mxu0 0
      %881 = vmatpush1.bf16.msra.mxu0 %v722
      %882 = vmatprep.subr.bf16.mxu0 0
      %883 = vmatpush1.bf16.msra.mxu0 %v723
      %884 = vmatprep.subr.bf16.mxu0 0
      %885 = vmatpush1.bf16.msra.mxu0 %v724
      %886 = vmatprep.subr.bf16.mxu0 0
      %887 = vmatpush1.bf16.msra.mxu0 %v725
      %888 = vmatprep.subr.bf16.mxu0 0
      %889 = vmatpush1.bf16.msra.mxu0 %v726
      %890 = vmatprep.subr.bf16.mxu0 0
      %891 = vmatpush1.bf16.msra.mxu0 %v727
      %892 = vmatprep.subr.bf16.mxu0 0
      %893 = vmatpush1.bf16.msra.mxu0 %v728
      %894 = vmatprep.subr.bf16.mxu0 0
      %895 = vmatpush1.bf16.msra.mxu0 %v729
      %896 = vmatprep.subr.bf16.mxu0 0
      %897 = vmatpush1.bf16.msra.mxu0 %v730
      %898 = vmatprep.subr.bf16.mxu0 0
      %899 = vmatpush1.bf16.msra.mxu0 %v731
      %900 = vmatprep.subr.bf16.mxu0 0
      %901 = vmatpush1.bf16.msra.mxu0 %v732
      %902 = vmatprep.mubr.bf16.mxu0 %v432
      %903 = vmatmul.mubr.bf16.gmra.mrb[0].mxu0 %v431
      %v904 = vpop.f32.mrb[0].mxu0
      %v905 = vadd.f32 %v864, %v904
      %v906 = vpop.f32.mrb[0].mxu0
      %v907 = vpop.f32.mrb[0].mxu0
      %v908 = vadd.f32 %v867, %v907
      %v909 = vpop.f32.mrb[0].mxu0
      %910 = vdwg.mxu0
      %911 = vmatprep.subr.bf16.mxu0 0
      %912 = vmatpush1.bf16.msra.mxu0 %v733
      %913 = vmatprep.subr.bf16.mxu0 0
      %914 = vmatpush1.bf16.msra.mxu0 %v734
      %915 = vmatprep.subr.bf16.mxu0 0
      %916 = vmatpush1.bf16.msra.mxu0 %v735
      %917 = vmatprep.subr.bf16.mxu0 0
      %918 = vmatpush1.bf16.msra.mxu0 %v736
      %919 = vmatprep.subr.bf16.mxu0 0
      %920 = vmatpush1.bf16.msra.mxu0 %v737
      %921 = vmatprep.subr.bf16.mxu0 0
      %922 = vmatpush1.bf16.msra.mxu0 %v738
      %923 = vmatprep.subr.bf16.mxu0 0
      %924 = vmatpush1.bf16.msra.mxu0 %v739
      %925 = vmatprep.subr.bf16.mxu0 0
      %926 = vmatpush1.bf16.msra.mxu0 %v740
      %927 = vmatprep.subr.bf16.mxu0 0
      %928 = vmatpush1.bf16.msra.mxu0 %v741
      %929 = vmatprep.subr.bf16.mxu0 0
      %930 = vmatpush1.bf16.msra.mxu0 %v742
      %931 = vmatprep.subr.bf16.mxu0 0
      %932 = vmatpush1.bf16.msra.mxu0 %v743
      %933 = vmatprep.subr.bf16.mxu0 0
      %934 = vmatpush1.bf16.msra.mxu0 %v744
      %935 = vmatprep.subr.bf16.mxu0 0
      %936 = vmatpush1.bf16.msra.mxu0 %v745
      %937 = vmatprep.subr.bf16.mxu0 0
      %938 = vmatpush1.bf16.msra.mxu0 %v746
      %939 = vmatprep.subr.bf16.mxu0 0
      %940 = vmatpush1.bf16.msra.mxu0 %v747
      %941 = vmatprep.subr.bf16.mxu0 0
      %942 = vmatpush1.bf16.msra.mxu0 %v748
      %943 = vmatprep.mubr.bf16.mxu0 %v434
      %944 = vmatmul.mubr.bf16.gmra.mrb[0].mxu0 %v433
      %v945 = vpop.f32.mrb[0].mxu0
      %v946 = vadd.f32 %v905, %v945
      %v947 = vpop.f32.mrb[0].mxu0
      %v948 = vpop.f32.mrb[0].mxu0
      %v949 = vadd.f32 %v908, %v948
      %v950 = vpop.f32.mrb[0].mxu0
      %951 = vdwg.mxu0
      %952 = vmatprep.subr.bf16.mxu0 0
      %953 = vmatpush1.bf16.msra.mxu0 %v749
      %954 = vmatprep.subr.bf16.mxu0 0
      %955 = vmatpush1.bf16.msra.mxu0 %v750
      %956 = vmatprep.subr.bf16.mxu0 0
      %957 = vmatpush1.bf16.msra.mxu0 %v751
      %958 = vmatprep.subr.bf16.mxu0 0
      %959 = vmatpush1.bf16.msra.mxu0 %v752
      %960 = vmatprep.subr.bf16.mxu0 0
      %961 = vmatpush1.bf16.msra.mxu0 %v753
      %962 = vmatprep.subr.bf16.mxu0 0
      %963 = vmatpush1.bf16.msra.mxu0 %v754
      %964 = vmatprep.subr.bf16.mxu0 0
      %965 = vmatpush1.bf16.msra.mxu0 %v755
      %966 = vmatprep.subr.bf16.mxu0 0
      %967 = vmatpush1.bf16.msra.mxu0 %v756
      %968 = vmatprep.subr.bf16.mxu0 0
      %969 = vmatpush1.bf16.msra.mxu0 %v757
      %970 = vmatprep.subr.bf16.mxu0 0
      %971 = vmatpush1.bf16.msra.mxu0 %v758
      %972 = vmatprep.subr.bf16.mxu0 0
      %973 = vmatpush1.bf16.msra.mxu0 %v759
      %974 = vmatprep.subr.bf16.mxu0 0
      %975 = vmatpush1.bf16.msra.mxu0 %v760
      %976 = vmatprep.subr.bf16.mxu0 0
      %977 = vmatpush1.bf16.msra.mxu0 %v761
      %978 = vmatprep.subr.bf16.mxu0 0
      %979 = vmatpush1.bf16.msra.mxu0 %v762
      %980 = vmatprep.subr.bf16.mxu0 0
      %981 = vmatpush1.bf16.msra.mxu0 %v763
      %982 = vmatprep.subr.bf16.mxu0 0
      %983 = vmatpush1.bf16.msra.mxu0 %v764
      %984 = vmatprep.mubr.bf16.mxu0 %v436
      %985 = vmatmul.mubr.bf16.gmra.mrb[0].mxu0 %v435
      %v986 = vpop.f32.mrb[0].mxu0
      %v987 = vadd.f32 %v946, %v986
      %v988 = vpop.f32.mrb[0].mxu0
      %v989 = vpop.f32.mrb[0].mxu0
      %v990 = vadd.f32 %v949, %v989
      %v991 = vpop.f32.mrb[0].mxu0
      %992 = vdwg.mxu0
      %v993 = vmax.f32 %v987, 0.0
      %v994 = vmax.f32 %v990, 0.0
      %v995 = vld [vmem:[#allocation2] sm:$0x1]
      %v996 = vadd.f32 %v993, %v994
      %v997 = vrot.slane %v996, 4
      %v998 = vadd.f32 %v996, %v997
      %v999 = vrot.slane %v998, 2
      %v1000 = vadd.f32 %v998, %v999
      %v1001 = vrot.slane %v1000, 1
      %v1002 = vadd.f32 %v1000, %v1001
      %v1003 = vadd.f32 %v995, %v1002
      %1004 = vst [vmem:[#allocation2] sm:$0x1] %v1003
      // Predicated region
      $region45: #{discriminator_forward.3} parent=39 // pred_check
        %p1005 = pneg %p257
      $region46: #{discriminator_forward.3} parent=39 // pred_check_branch
        %1007 = sbr.rel (%p1005) target = $region48
      $region47: #{discriminator_forward.3} parent=39 // pred_region
        %v1008 = vld [vmem:[#allocation2] sm:$0x1]
        %v1009 = vmul.f32 %v1008, 0.0625
        %v1010 = vld [vmem:[%s3] sm:$0x1]
        %v1011 = vmul.f32 %v1009, %v1010
        %vm1012 = vcmask 1040384
        %v1013 = vsel %vm1012, %v1011, 0.0
        %1014 = vadd.xlane.f32.xlu0 %v1013
        %v1015 = vpop.xlane.xlu0 %1014
        %v1016 = vld [vmem:[#allocation3] sm:$0x1]
        %v1017 = vadd.f32 %v1015, %v1016
        %v1018 = vxor.u32 %v1017, 2147483648
        %v1019 = vmul.f32 %v1018, 1.442695
        %v1020 = vpow.pop %v1019
        %v1021 = vadd.f32 %v1020, 1.0
        %v1022 = vrcp.pop %v1021
        %v1023 = vmul.f32 1.0, %v1022
        %s1025 = vtos %v1023
        %v1026 = vstv %s1025
        %1028 = vst [vmem:[%s255] sm:$0xff] %v1026
      $region48: #{discriminator_forward.3} parent=39 // pred_fallthru
        _
      %p1029 = scmp.lt.s32.totalorder %s22, 1
      %s1030 = scalar_select %p1029, %s22, 1
      %s1031 = smul.addr %s1030, 8
      %s1032 = scalar_lea.vmem %s5, %s1031
      // Predicated region
      $region49: #{discriminator_forward.3} parent=39 // pred_check
        %p1033 = pneg %p160
      $region50: #{discriminator_forward.3} parent=39 // pred_check_branch
        %1035 = sbr.rel (%p1033) target = $region52
      $region51: #{discriminator_forward.3} parent=39 // pred_region
        _
      $region52: #{discriminator_forward.3} parent=39 // pred_fallthru
        _
    $region40: #{discriminator_forward.3} parent=5 // pred_fallthru
      _
    %p1036 = scmp.le.s32.totalorder 2, %s13
    // Predicated region
    $region53: #{discriminator_forward.3} parent=5 // pred_check
      %p1037 = pneg %p1036
    $region54: #{discriminator_forward.3} parent=5 // pred_check_branch
      %1039 = sbr.rel (%p1037) target = $region56
    $region55: #{discriminator_forward.3} parent=5 // pred_region
      %s1040 = ssub.s32 %s13, 2
      // Predicated region
      $region57: #{discriminator_forward.3} parent=55 // pred_check
        %p1041 = pneg %p166
      $region58: #{discriminator_forward.3} parent=55 // pred_check_branch
        %1043 = sbr.rel (%p1041) target = $region60
      $region59: #{discriminator_forward.3} parent=55 // pred_region
        %p1044 = scmp.lt.s32.totalorder %s24, 1
        %s1045 = scalar_select %p1044, %s24, 1
        %s1046 = smul.addr %s1045, 8
        %s1047 = scalar_lea.vmem %s5, %s1046
      $region60: #{discriminator_forward.3} parent=55 // pred_fallthru
        _
    $region56: #{discriminator_forward.3} parent=5 // pred_fallthru
      _
  $region6: #{discriminator_forward.3} parent=0 // loop_footer
    %s17 = sadd.s32 1, %s13
  $region7: #{discriminator_forward.3} parent=0 // loop_footer_branch
    %12 = sbr.rel target = $region3
  $region8: #{discriminator_forward.3} parent=0 // loop_exit
    _

</llo_original>
